<compile_context>
chip_gen: v6e
topology: v6e:2x2x1
jax: 0.10.0
libtpu: 0.0.40
codegen_flags: <defaults>
</compile_context>

<pallas_src>
import functools

import jax
import jax.numpy as jnp
from jax.experimental import pallas as pl
from jax.experimental.pallas import tpu as pltpu


def _vmem_budget_bytes():
    """Generation-aware (block_byte_budget, vmem_limit_bytes).

    block_byte_budget: bytes allowed for the Pallas-managed, double-buffered
    block copies of the large operands (~3/8 of physical VMEM).
    vmem_limit_bytes: scoped-VMEM limit handed to Mosaic (~3/4 of VMEM).
    v5e/v6e (128 MiB) -> 48 MiB / 96 MiB ; v7x (64 MiB/TC) -> 24 MiB / 48 MiB.
    """
    vmem = 64 * 1024 * 1024  # conservative (v7x-sized) fallback
    try:
        vmem = int(pltpu.get_tpu_info().vmem_capacity_bytes)
    except Exception:
        pass
    vmem = max(vmem, 16 * 1024 * 1024)
    return (vmem * 3) // 8, (vmem * 3) // 4


def _largest_divisor_leq(n, cap):
    cap = max(1, min(n, cap))
    for d in range(cap, 0, -1):
        if n % d == 0:
            return d
    return 1


def _excite(pooled_f32, w1t, w2t):
    """Batched excitation: (tb, C) pooled means -> (tb, C) sigmoid gates (f32).

    Weights are used in their native dtype (bf16 weights -> native MXU
    bf16 x bf16 -> f32); preferred_element_type keeps accumulation in f32.
    """
    h = jnp.dot(pooled_f32.astype(w1t.dtype), w1t,
                preferred_element_type=jnp.float32)              # (tb, Cr)
    h = jnp.maximum(h, 0.0)
    s = jnp.dot(h.astype(w2t.dtype), w2t,
                preferred_element_type=jnp.float32)              # (tb, C)
    return jax.nn.sigmoid(s)


def _scaled(x_block, gate_f32, out_dtype):
    """x * gate.  Multiply in bf16/f16 when x is 16-bit (native VPU on
    v6e/v7x, halves VALU work and vreg footprint); f32 otherwise.  The gate is
    always computed in f32 upstream, so numerics are unaffected."""
    if x_block.dtype.itemsize == 2:
        g = gate_f32.astype(x_block.dtype)
        return (x_block * g[:, :, None]).astype(out_dtype)
    return (x_block.astype(jnp.float32) * gate_f32[:, :, None]).astype(out_dtype)


# ---------------------------------------------------------------------------
# Path A: fused kernel -- whole (tb, C, HW) slab resident; x touched once.
# ---------------------------------------------------------------------------
def _se_fused_kernel(x_ref, w1t_ref, w2t_ref, o_ref, *, inv_hw):
    # Pool in f32 directly off the load (no full f32 copy of the slab kept
    # live across the excitation), then re-read x_ref for the scale so the
    # compiler can stream it vreg-by-vreg.
    pooled = jnp.sum(x_ref[...].astype(jnp.float32), axis=-1) * inv_hw   # (tb, C)
    gate = _excite(pooled, w1t_ref[...], w2t_ref[...])                   # (tb, C) f32
    o_ref[...] = _scaled(x_ref[...], gate, o_ref.dtype)


# ---------------------------------------------------------------------------
# Path B phase 1: streamed pooling + gate computation (spatially tiled).
# ---------------------------------------------------------------------------
def _se_gate_kernel(x_ref, w1t_ref, w2t_ref, gate_ref, acc_ref, *,
                    inv_hw, ts, hw, need_mask):
    s = pl.program_id(1)

    @pl.when(s == 0)
    def _():
        acc_ref[...] = jnp.zeros_like(acc_ref)

    x = x_ref[...].astype(jnp.float32)                          # (tb, C, ts)
    if need_mask:  # last spatial tile extends past HW: zero the padded lanes
        lane = jax.lax.broadcasted_iota(jnp.int32, x.shape, dimension=2)
        x = jnp.where(s * ts + lane < hw, x, 0.0)
    acc_ref[...] += jnp.sum(x, axis=-1)                         # f32 accumulation

    @pl.when(s == pl.num_programs(1) - 1)
    def _():
        pooled = acc_ref[...] * inv_hw                          # (tb, C)
        gate = _excite(pooled, w1t_ref[...], w2t_ref[...])      # (tb, C) f32
        gate_ref[...] = gate[:, :, None].astype(gate_ref.dtype)


# ---------------------------------------------------------------------------
# Path B phase 2: apply the per-(batch, channel) gate to x (spatially tiled).
# ---------------------------------------------------------------------------
def _se_scale_kernel(x_ref, gate_ref, o_ref):
    # NOTE: the last spatial tile may read past HW (undefined padded data);
    # Pallas only writes the in-bounds portion of the output block back, so
    # those garbage products never reach HBM.
    g = gate_ref[...][:, :, 0]                                  # (tb, C) f32
    o_ref[...] = _scaled(x_ref[...], g, o_ref.dtype)


def se_block(x_nchw, w1, w2):
    """SEBlock forward. x: (B, C, H, W); w1: (C//r, C); w2: (C, C//r)."""
    B, C, H, W = x_nchw.shape
    Cr = w1.shape[0]
    HW = H * W
    inv_hw = 1.0 / HW
    itemsize = jnp.dtype(x_nchw.dtype).itemsize

    block_budget, vmem_limit = _vmem_budget_bytes()

    x_flat = x_nchw.reshape(B, C, HW)
    w1t = w1.T                        # (C, Cr): excitation becomes (tb,C)@(C,Cr)
    w2t = w2.T                        # (Cr, C): then (tb,Cr)@(Cr,C)

    slab_bytes = C * HW * itemsize
    # Input and output slabs are each double-buffered -> ~4 live block copies.
    max_tb_fused = block_budget // (4 * slab_bytes)

    if max_tb_fused >= 1:
        # ---------------- Path A: fused, single pass over x ----------------
        tb_cap = max_tb_fused
        if B >= 2:
            tb_cap = min(tb_cap, B // 2)   # >=2 grid steps -> both v7x cores busy
        tb = _largest_divisor_leq(B, tb_cap)
        nb = B // tb
        out_flat = pl.pallas_call(
            functools.partial(_se_fused_kernel, inv_hw=inv_hw),
            out_shape=jax.ShapeDtypeStruct((B, C, HW), x_flat.dtype),
            grid_spec=pltpu.PrefetchScalarGridSpec(
                num_scalar_prefetch=0,
                grid=(nb,),
                in_specs=[
                    pl.BlockSpec((tb, C, HW), lambda b: (b, 0, 0)),
                    pl.BlockSpec((C, Cr), lambda b: (0, 0)),
                    pl.BlockSpec((Cr, C), lambda b: (0, 0)),
                ],
                out_specs=pl.BlockSpec((tb, C, HW), lambda b: (b, 0, 0)),
            ),
            compiler_params=pltpu.CompilerParams(
                dimension_semantics=("parallel",),
                vmem_limit_bytes=vmem_limit),
        )(x_flat, w1t, w2t)
        return out_flat.reshape(B, C, H, W)

    # -------------- Path B: two-phase, spatially tiled (big C*HW) ------------
    hw_pad = ((HW + 127) // 128) * 128

    # Batch tile sized against the stricter phase-2 footprint (x + out blocks,
    # both double-buffered -> 4 copies) at a >=1024-lane spatial target, and
    # capped at B//2 so the parallel batch axis keeps both v7x cores busy.
    tb_cap = max(1, block_budget // (4 * C * min(1024, hw_pad) * itemsize))
    if B >= 2:
        tb_cap = min(tb_cap, B // 2)
    tb = _largest_divisor_leq(B, tb_cap)
    # TODO(synk): when B == 1 on v7x, split the phase-1 spatial reduction across
    # the two TensorCores (partial accumulators + tiny combine); currently one
    # core idles during phase 1 for B == 1.

    def _spatial_tile(n_big_blocks):
        ts = (block_budget // (n_big_blocks * tb * C * itemsize) // 128) * 128
        return int(max(128, min(ts, hw_pad)))

    # Phase 1: only the streamed x block is large (gate output is (tb, C, 1)),
    # so size the spatial tile against one double-buffered input (divisor 2).
    ts1 = _spatial_tile(2)
    ns1 = pl.cdiv(HW, ts1)
    need_mask = (ns1 * ts1 != HW)

    gates = pl.pallas_call(
        functools.partial(_se_gate_kernel, inv_hw=inv_hw, ts=ts1, hw=HW,
                          need_mask=need_mask),
        out_shape=jax.ShapeDtypeStruct((B, C, 1), jnp.float32),
        grid_spec=pltpu.PrefetchScalarGridSpec(
            num_scalar_prefetch=0,
            grid=(B // tb, ns1),
            in_specs=[
                pl.BlockSpec((tb, C, ts1), lambda b, s: (b, 0, s)),
                pl.BlockSpec((C, Cr), lambda b, s: (0, 0)),
                pl.BlockSpec((Cr, C), lambda b, s: (0, 0)),
            ],
            out_specs=pl.BlockSpec((tb, C, 1), lambda b, s: (b, 0, 0)),
            scratch_shapes=[pltpu.VMEM((tb, C), jnp.float32)],
        ),
        compiler_params=pltpu.CompilerParams(
            dimension_semantics=("parallel", "arbitrary"),
            vmem_limit_bytes=vmem_limit),
    )(x_flat, w1t, w2t)

    # Phase 2: x block + out block, each double-buffered (divisor 4).
    ts2 = _spatial_tile(4)
    ns2 = pl.cdiv(HW, ts2)

    out_flat = pl.pallas_call(
        _se_scale_kernel,
        out_shape=jax.ShapeDtypeStruct((B, C, HW), x_flat.dtype),
        grid_spec=pltpu.PrefetchScalarGridSpec(
            num_scalar_prefetch=0,
            grid=(B // tb, ns2),
            in_specs=[
                pl.BlockSpec((tb, C, ts2), lambda b, s: (b, 0, s)),
                pl.BlockSpec((tb, C, 1), lambda b, s: (b, 0, 0)),
            ],
            out_specs=pl.BlockSpec((tb, C, ts2), lambda b, s: (b, 0, s)),
        ),
        compiler_params=pltpu.CompilerParams(
            dimension_semantics=("parallel", "parallel"),
            vmem_limit_bytes=vmem_limit),
    )(x_flat, gates)
    return out_flat.reshape(B, C, H, W)


def se_block_ref(x, w1, w2):
    # Pure-JAX reference mirroring the PyTorch module.
    y = jnp.mean(x, axis=(2, 3))                       # (B, C)
    y = jnp.maximum(y @ w1.T, 0.0)                     # (B, C//r)
    y = jax.nn.sigmoid(y @ w2.T)                       # (B, C)
    return x * y[:, :, None, None]


if __name__ == "__main__":
    B, C, H, W = 2, 64, 16, 16        # HW = 256: lane-dense (multiple of 128)
    reduction = 16
    Cr = C // reduction

    key = jax.random.PRNGKey(0)
    kx, k1, k2 = jax.random.split(key, 3)

    x = jax.random.normal(kx, (B, C, H, W), dtype=jnp.float32)
    # Weights follow nn.Linear convention: (out_features, in_features).
    w1 = jax.random.normal(k1, (Cr, C), dtype=jnp.float32) * (1.0 / jnp.sqrt(C))
    w2 = jax.random.normal(k2, (C, Cr), dtype=jnp.float32) * (1.0 / jnp.sqrt(Cr))

    out = jax.jit(se_block)(x, w1, w2)
    out = jax.block_until_ready(out)

    ref = se_block_ref(x, w1, w2)
    assert out.shape == (B, C, H, W)
    assert jnp.allclose(out, ref, atol=1e-5, rtol=1e-5)

    print("KERNEL_OK")
</pallas_src>

<mosaic_0001>
module attributes {stable_mosaic.version = 11 : i64} {
  func.func @_se_fused_kernel(%arg0: i32, %arg1: memref<1x64x256xf32, #tpu.memory_space<vmem>>, %arg2: memref<64x4xf32, #tpu.memory_space<vmem>>, %arg3: memref<4x64xf32, #tpu.memory_space<vmem>>, %arg4: memref<1x64x256xf32, #tpu.memory_space<vmem>>) attributes {dimension_semantics = [#tpu.dimension_semantics<parallel>], iteration_bounds = array<i64: 2>, scalar_prefetch = 0 : i64, scratch_operands = 0 : i64, tpu.core_type = #tpu.core_type<tc>, window_params = [{transform_indices = @transform_0, window_bounds = array<i64: 1, 64, 256>}, {pipeline_mode = #tpu.pipeline_mode<synchronous>, transform_indices = @transform_1, window_bounds = array<i64: 64, 4>}, {pipeline_mode = #tpu.pipeline_mode<synchronous>, transform_indices = @transform_2, window_bounds = array<i64: 4, 64>}, {transform_indices = @transform_3, window_bounds = array<i64: 1, 64, 256>}]} {
    %c0 = arith.constant 0 : index
    %c0_0 = arith.constant 0 : index
    %c0_1 = arith.constant 0 : index
    %0 = vector.load %arg1[%c0, %c0_0, %c0_1] : memref<1x64x256xf32, #tpu.memory_space<vmem>>, vector<1x64x256xf32>
    %cst = arith.constant dense<0.000000e+00> : vector<1x64xf32>
    %1 = vector.multi_reduction <add>, %0, %cst [2] : vector<1x64x256xf32> to vector<1x64xf32>
    %cst_2 = arith.constant 3.906250e-03 : f32
    %2 = vector.broadcast %cst_2 : f32 to vector<1x64xf32>
    %3 = arith.mulf %1, %2 : vector<1x64xf32>
    %c0_3 = arith.constant 0 : index
    %c0_4 = arith.constant 0 : index
    %4 = vector.load %arg2[%c0_3, %c0_4] : memref<64x4xf32, #tpu.memory_space<vmem>>, vector<64x4xf32>
    %c0_5 = arith.constant 0 : index
    %c0_6 = arith.constant 0 : index
    %5 = vector.load %arg3[%c0_5, %c0_6] : memref<4x64xf32, #tpu.memory_space<vmem>>, vector<4x64xf32>
    %cst_7 = arith.constant dense<0.000000e+00> : vector<1x4xf32>
    %6 = tpu.matmul %3, %4, %cst_7 {dimension_numbers = #tpu.dot_dimension_numbers<[1], [0], [0], [1], [0, 0, 1, 1], [], []>} : vector<1x64xf32>, vector<64x4xf32>, vector<1x4xf32> -> vector<1x4xf32>
    %cst_8 = arith.constant 0.000000e+00 : f32
    %7 = vector.broadcast %cst_8 : f32 to vector<1x4xf32>
    %8 = arith.maximumf %6, %7 : vector<1x4xf32>
    %cst_9 = arith.constant dense<0.000000e+00> : vector<1x64xf32>
    %9 = tpu.matmul %8, %5, %cst_9 {dimension_numbers = #tpu.dot_dimension_numbers<[1], [0], [0], [1], [0, 0, 1, 1], [], []>} : vector<1x4xf32>, vector<4x64xf32>, vector<1x64xf32> -> vector<1x64xf32>
    %10 = arith.negf %9 : vector<1x64xf32>
    %11 = math.exp %10 : vector<1x64xf32>
    %cst_10 = arith.constant 1.000000e+00 : f32
    %12 = vector.broadcast %cst_10 : f32 to vector<1x64xf32>
    %13 = arith.addf %12, %11 : vector<1x64xf32>
    %14 = arith.divf %12, %13 : vector<1x64xf32>
    %c0_11 = arith.constant 0 : index
    %c0_12 = arith.constant 0 : index
    %c0_13 = arith.constant 0 : index
    %15 = vector.load %arg1[%c0_11, %c0_12, %c0_13] : memref<1x64x256xf32, #tpu.memory_space<vmem>>, vector<1x64x256xf32>
    %16 = vector.shape_cast %14 : vector<1x64xf32> to vector<1x64x1xf32>
    %17 = vector.broadcast %16 : vector<1x64x1xf32> to vector<1x64x256xf32>
    %18 = arith.mulf %15, %17 : vector<1x64x256xf32>
    %c0_14 = arith.constant 0 : index
    %c0_15 = arith.constant 0 : index
    %c0_16 = arith.constant 0 : index
    %19 = vector.load %arg4[%c0_14, %c0_15, %c0_16] : memref<1x64x256xf32, #tpu.memory_space<vmem>>, vector<1x64x256xf32>
    tpu.vector_store %arg4[%c0_14, %c0_15, %c0_16], %18 {strides = array<i32>} : memref<1x64x256xf32, #tpu.memory_space<vmem>>, vector<1x64x256xf32>,
    return
  }
  func.func @transform_0(%arg0: i32) -> (i32, i32, i32) {
    %c0_i32 = arith.constant 0 : i32
    %c0_i32_0 = arith.constant 0 : i32
    %c0_i32_1 = arith.constant 0 : i32
    return %arg0, %c0_i32, %c0_i32_0 : i32, i32, i32
  }
  func.func @transform_1(%arg0: i32) -> (i32, i32) {
    %c0_i32 = arith.constant 0 : i32
    %c0_i32_0 = arith.constant 0 : i32
    %c0_i32_1 = arith.constant 0 : i32
    return %c0_i32, %c0_i32_0 : i32, i32
  }
  func.func @transform_2(%arg0: i32) -> (i32, i32) {
    %c0_i32 = arith.constant 0 : i32
    %c0_i32_0 = arith.constant 0 : i32
    %c0_i32_1 = arith.constant 0 : i32
    return %c0_i32, %c0_i32_0 : i32, i32
  }
  func.func @transform_3(%arg0: i32) -> (i32, i32, i32) {
    %c0_i32 = arith.constant 0 : i32
    %c0_i32_0 = arith.constant 0 : i32
    %c0_i32_1 = arith.constant 0 : i32
    return %arg0, %c0_i32, %c0_i32_0 : i32, i32, i32
  }
}

</mosaic_0001>

<llo_original>
// kernel: se_block.1
$region0: #{se_block.1}
  #allocation0 [shape = 'u32[]', space=smem, size = 0x4, offset = 0x4, fixed_abs, tag = 'smem constant byte address 0x4 - core index']
  #allocation1 [shape = 'u32[144,128]{1,0:T(1,128)}', space=vmem, size = 0x12000, scoped, tag = 'internal scratch']
  %s0 = inlined_call_operand.vmem [shape: f32[2,64,256], index: 0, kind: input, shape index: {}]
  %s1 = inlined_call_operand.vmem [shape: f32[64,4], index: 1, kind: input, shape index: {}]
  %s2 = inlined_call_operand.vmem [shape: f32[4,64], index: 2, kind: input, shape index: {}]
  %s3 = inlined_call_operand.vmem [shape: f32[2,64,256], index: 3, kind: output, shape index: {}]
  %s4 = sld [smem:[#allocation0]]
  $region45: #{se_block.1} parent=0
    _
  %s6 = ssub.s32 1, %s4
  %s7 = scalar_select 0, %s6, %s4
  loop: start=0, step=1, limit=4
  $region2: #{se_block.1} parent=0 // loop_pre_header
    _
  $region3: #{se_block.1} parent=0 // loop_header
    %s9 = sphi 0, %s13
    %p10 = scmp.ge.s32.totalorder %s9, 4
    %s19 = sphi 0, %s21
    %s22 = sphi 0, %s19
    %s23 = sphi 0, %s22
    %s39 = sphi 0, %s23
    %s43 = sphi 0, %s43
    %s45 = sphi 0, %s43
    %s46 = sphi 0, %s45
    %s60 = sphi 0, %s46
    %s64 = sphi 0, %s64
    %s66 = sphi 0, %s64
    %s67 = sphi 0, %s66
    %s81 = sphi 0, %s67
    %s87 = sphi 0, %s89
    %s90 = sphi 0, %s87
    %s91 = sphi 0, %s90
    %s107 = sphi 0, %s91
  $region4: #{se_block.1} parent=0 // loop_header_branch
    %12 = sbr.rel (%p10) target = $region8
  $region5: #{se_block.1} parent=0 // loop_body
    %s14 = ssub.s32 %s9, 1
    %s15 = ssub.s32 %s9, 2
    %s16 = sadd.s32 %s9, 1
    %s17 = ssub.s32 %s9, %s16
    %p18 = scmp.eq.s32.totalorder %s17, 0
    %s20 = sadd.s32 %s19, 1
    %s21 = scalar_select %p18, %s19, %s20
    %p24 = pneg %p18
    %p25 = scmp.eq.s32.totalorder %s9, 1
    %p26 = por %p24, %p25
    %p27 = scmp.ne.s32.totalorder %s19, %s22
    %p28 = scmp.eq.s32.totalorder %s9, 0
    %p29 = por %p27, %p28
    %p30 = scmp.ne.s32.totalorder %s19, %s22
    %p31 = scmp.eq.s32.totalorder %s14, 1
    %p32 = por %p30, %p31
    %p33 = scmp.ne.s32.totalorder %s22, %s23
    %p34 = scmp.eq.s32.totalorder %s14, 0
    %p35 = por %p33, %p34
    %p36 = scmp.ne.s32.totalorder %s22, %s23
    %p37 = scmp.eq.s32.totalorder %s15, 1
    %p38 = por %p36, %p37
    %p40 = scmp.ne.s32.totalorder %s23, %s39
    %p41 = scmp.eq.s32.totalorder %s15, 0
    %p42 = por %p40, %p41
    %s44 = sadd.s32 %s43, 1
    %p47 = scmp.eq.s32.totalorder %s9, 1
    %p48 = scmp.ne.s32.totalorder %s43, %s45
    %p49 = scmp.eq.s32.totalorder %s9, 0
    %p50 = por %p48, %p49
    %p51 = scmp.ne.s32.totalorder %s43, %s45
    %p52 = scmp.eq.s32.totalorder %s14, 1
    %p53 = por %p51, %p52
    %p54 = scmp.ne.s32.totalorder %s45, %s46
    %p55 = scmp.eq.s32.totalorder %s14, 0
    %p56 = por %p54, %p55
    %p57 = scmp.ne.s32.totalorder %s45, %s46
    %p58 = scmp.eq.s32.totalorder %s15, 1
    %p59 = por %p57, %p58
    %p61 = scmp.ne.s32.totalorder %s46, %s60
    %p62 = scmp.eq.s32.totalorder %s15, 0
    %p63 = por %p61, %p62
    %s65 = sadd.s32 %s64, 1
    %p68 = scmp.eq.s32.totalorder %s9, 1
    %p69 = scmp.ne.s32.totalorder %s64, %s66
    %p70 = scmp.eq.s32.totalorder %s9, 0
    %p71 = por %p69, %p70
    %p72 = scmp.ne.s32.totalorder %s64, %s66
    %p73 = scmp.eq.s32.totalorder %s14, 1
    %p74 = por %p72, %p73
    %p75 = scmp.ne.s32.totalorder %s66, %s67
    %p76 = scmp.eq.s32.totalorder %s14, 0
    %p77 = por %p75, %p76
    %p78 = scmp.ne.s32.totalorder %s66, %s67
    %p79 = scmp.eq.s32.totalorder %s15, 1
    %p80 = por %p78, %p79
    %p82 = scmp.ne.s32.totalorder %s67, %s81
    %p83 = scmp.eq.s32.totalorder %s15, 0
    %p84 = por %p82, %p83
    %s85 = ssub.s32 %s9, %s16
    %p86 = scmp.eq.s32.totalorder %s85, 0
    %s88 = sadd.s32 %s87, 1
    %s89 = scalar_select %p86, %s87, %s88
    %p92 = pneg %p86
    %p93 = scmp.eq.s32.totalorder %s9, 1
    %p94 = por %p92, %p93
    %p95 = scmp.ne.s32.totalorder %s87, %s90
    %p96 = scmp.eq.s32.totalorder %s9, 0
    %p97 = por %p95, %p96
    %p98 = scmp.ne.s32.totalorder %s87, %s90
    %p99 = scmp.eq.s32.totalorder %s14, 1
    %p100 = por %p98, %p99
    %p101 = scmp.ne.s32.totalorder %s90, %s91
    %p102 = scmp.eq.s32.totalorder %s14, 0
    %p103 = por %p101, %p102
    %p104 = scmp.ne.s32.totalorder %s90, %s91
    %p105 = scmp.eq.s32.totalorder %s15, 1
    %p106 = por %p104, %p105
    %p108 = scmp.ne.s32.totalorder %s91, %s107
    %p109 = scmp.eq.s32.totalorder %s15, 0
    %p110 = por %p108, %p109
    %p111 = scmp.le.s32.totalorder 1, %s9
    %p112 = scmp.lt.s32.totalorder %s9, 3
    %p113 = pnand %p111, %p112
    %p114 = pneg %p113
    // Predicated region
    $region9: #{se_block.1} parent=5 // pred_check
      _
    $region10: #{se_block.1} parent=5 // pred_check_branch
      %116 = sbr.rel (%p113) target = $region12
    $region11: #{se_block.1} parent=5 // pred_region
      %s117 = ssub.s32 %s9, 1
      // Predicated region
      $region13: #{se_block.1} parent=11 // pred_check
        %p118 = pneg %p56
      $region14: #{se_block.1} parent=11 // pred_check_branch
        %120 = sbr.rel (%p118) target = $region16
      $region15: #{se_block.1} parent=11 // pred_region
        _
      $region16: #{se_block.1} parent=11 // pred_fallthru
        _
      // Predicated region
      $region17: #{se_block.1} parent=11 // pred_check
        %p121 = pneg %p77
      $region18: #{se_block.1} parent=11 // pred_check_branch
        %123 = sbr.rel (%p121) target = $region20
      $region19: #{se_block.1} parent=11 // pred_region
        _
      $region20: #{se_block.1} parent=11 // pred_fallthru
        _
    $region12: #{se_block.1} parent=5 // pred_fallthru
      _
    %p124 = scmp.lt.s32.totalorder %s9, 2
    // Predicated region
    $region21: #{se_block.1} parent=5 // pred_check
      %p125 = pneg %p124
    $region22: #{se_block.1} parent=5 // pred_check_branch
      %127 = sbr.rel (%p125) target = $region24
    $region23: #{se_block.1} parent=5 // pred_region
      // Predicated region
      $region25: #{se_block.1} parent=23 // pred_check
        %p128 = pneg %p29
      $region26: #{se_block.1} parent=23 // pred_check_branch
        %130 = sbr.rel (%p128) target = $region28
      $region27: #{se_block.1} parent=23 // pred_region
        %p131 = scmp.lt.s32.totalorder %s9, 1
        %s132 = scalar_select %p131, %s9, 1
        %s133 = smul.addr %s132, 16
        %s134 = smul.addr %s133, 8
        %s135 = scalar_lea.vmem %s0, %s134
      $region28: #{se_block.1} parent=23 // pred_fallthru
        _
    $region24: #{se_block.1} parent=5 // pred_fallthru
      _
    %p136 = scmp.le.s32.totalorder 1, %s9
    %p137 = scmp.lt.s32.totalorder %s9, 3
    %p138 = pnand %p136, %p137
    %p139 = pneg %p138
    // Predicated region
    $region29: #{se_block.1} parent=5 // pred_check
      _
    $region30: #{se_block.1} parent=5 // pred_check_branch
      %141 = sbr.rel (%p138) target = $region32
    $region31: #{se_block.1} parent=5 // pred_region
      %s142 = ssub.s32 %s9, 1
      %p143 = scmp.lt.s32.totalorder %s14, 1
      %s144 = scalar_select %p143, %s14, 1
      %s145 = smul.addr %s144, 16
      %s146 = smul.addr %s145, 8
      %s147 = scalar_lea.vmem %s0, %s146
      %p148 = pneg %p35
      %p149 = pneg %p32
      %p150 = pneg %p56
      %p151 = pneg %p53
      %p152 = pneg %p77
      %p153 = pneg %p74
      %p154 = pneg %p103
      %p155 = pneg %p100
      %p156 = scmp.lt.s32.totalorder %s14, 1
      %s157 = scalar_select %p156, %s14, 1
      %s158 = smul.addr %s157, 16
      %s159 = smul.addr %s158, 8
      %s160 = scalar_lea.vmem %s3, %s159
      %p161 = scmp.lt.s32.totalorder %s14, 1
      %s162 = scalar_select %p161, %s14, 1
      %s163 = smul.addr %s162, 16
      %s164 = smul.addr %s163, 8
      %s165 = scalar_lea.vmem %s0, %s164
      %p166 = scmp.lt.s32.totalorder %s14, 1
      %s167 = scalar_select %p166, %s14, 1
      %s168 = smul.addr %s167, 16
      %s169 = smul.addr %s168, 8
      %s170 = scalar_lea.vmem %s3, %s169
      %v171 = vld [vmem:[%s165] sm:$0xff]
      %v172 = vld [vmem:[%s165 + $0x8] sm:$0xff]
      %v173 = vld [vmem:[%s165 + $0x10] sm:$0xff]
      %v174 = vld [vmem:[%s165 + $0x18] sm:$0xff]
      %v175 = vld [vmem:[%s165 + $0x20] sm:$0xff]
      %v176 = vld [vmem:[%s165 + $0x28] sm:$0xff]
      %v177 = vld [vmem:[%s165 + $0x30] sm:$0xff]
      %v178 = vld [vmem:[%s165 + $0x38] sm:$0xff]
      %v179 = vld [vmem:[%s165 + $0x40] sm:$0xff]
      %v180 = vld [vmem:[%s165 + $0x48] sm:$0xff]
      %v181 = vld [vmem:[%s165 + $0x50] sm:$0xff]
      %v182 = vld [vmem:[%s165 + $0x58] sm:$0xff]
      %v183 = vld [vmem:[%s165 + $0x60] sm:$0xff]
      %v184 = vld [vmem:[%s165 + $0x68] sm:$0xff]
      %v185 = vld [vmem:[%s165 + $0x70] sm:$0xff]
      %v186 = vld [vmem:[%s165 + $0x78] sm:$0xff]
      %v187 = vadd.f32 %v171, %v172
      %188 = vadd.xlane.f32.xlu0 %v187
      %v189 = vpop.xlane.xlu0 %188
      %v190 = vadd.f32 %v173, %v174
      %191 = vadd.xlane.f32.xlu0 %v190
      %v192 = vpop.xlane.xlu0 %191
      %v193 = vadd.f32 %v175, %v176
      %194 = vadd.xlane.f32.xlu0 %v193
      %v195 = vpop.xlane.xlu0 %194
      %v196 = vadd.f32 %v177, %v178
      %197 = vadd.xlane.f32.xlu0 %v196
      %v198 = vpop.xlane.xlu0 %197
      %v199 = vadd.f32 %v179, %v180
      %200 = vadd.xlane.f32.xlu0 %v199
      %v201 = vpop.xlane.xlu0 %200
      %v202 = vadd.f32 %v181, %v182
      %203 = vadd.xlane.f32.xlu0 %v202
      %v204 = vpop.xlane.xlu0 %203
      %v205 = vadd.f32 %v183, %v184
      %206 = vadd.xlane.f32.xlu0 %v205
      %v207 = vpop.xlane.xlu0 %206
      %v208 = vadd.f32 %v185, %v186
      %209 = vadd.xlane.f32.xlu0 %v208
      %v210 = vpop.xlane.xlu0 %209
      %v211 = vmul.f32 %v189, 0.00390625
      %v212 = vmul.f32 %v192, 0.00390625
      %v213 = vmul.f32 %v195, 0.00390625
      %v214 = vmul.f32 %v198, 0.00390625
      %v215 = vmul.f32 %v201, 0.00390625
      %v216 = vmul.f32 %v204, 0.00390625
      %v217 = vmul.f32 %v207, 0.00390625
      %v218 = vmul.f32 %v210, 0.00390625
      %v219 = vld [vmem:[%s1] sm:$0xff]
      %v220 = vld [vmem:[%s1 + $0x8] sm:$0xff]
      %v221 = vld [vmem:[%s1 + $0x10] sm:$0xff]
      %v222 = vld [vmem:[%s1 + $0x18] sm:$0xff]
      %v223 = vld [vmem:[%s1 + $0x20] sm:$0xff]
      %v224 = vld [vmem:[%s1 + $0x28] sm:$0xff]
      %v225 = vld [vmem:[%s1 + $0x30] sm:$0xff]
      %v226 = vld [vmem:[%s1 + $0x38] sm:$0xff]
      %v227 = vld [vmem:[%s2] sm:$0xf]
      %v236 = vlaneseq
      %v237 = vand.u32 %v236, 127
      %v238 = vlaneseq
      %v239 = vshrl.u32 %v238, 7
      %v240 = vsub.s32 %v237, %v239
      %v241 = vrot.slane %v211, %v240
      %v242 = vadd.s32 %v237, 4294967288
      %v243 = vlaneseq
      %v244 = vshrl.u32 %v243, 7
      %v245 = vsub.s32 %v242, %v244
      %v246 = vrot.slane %v212, %v245
      %vm247 = vcmask 130112
      %v248 = vsel %vm247, %v246, %v241
      %v249 = vadd.s32 %v237, 4294967280
      %v250 = vlaneseq
      %v251 = vshrl.u32 %v250, 7
      %v252 = vsub.s32 %v249, %v251
      %v253 = vrot.slane %v213, %v252
      %vm254 = vcmask 195712
      %v255 = vsel %vm254, %v253, %v248
      %v256 = vadd.s32 %v237, 4294967272
      %v257 = vlaneseq
      %v258 = vshrl.u32 %v257, 7
      %v259 = vsub.s32 %v256, %v258
      %v260 = vrot.slane %v214, %v259
      %vm261 = vcmask 261312
      %v262 = vsel %vm261, %v260, %v255
      %v263 = vadd.s32 %v237, 4294967264
      %v264 = vlaneseq
      %v265 = vshrl.u32 %v264, 7
      %v266 = vsub.s32 %v263, %v265
      %v267 = vrot.slane %v215, %v266
      %vm268 = vcmask 326912
      %v269 = vsel %vm268, %v267, %v262
      %v270 = vadd.s32 %v237, 4294967256
      %v271 = vlaneseq
      %v272 = vshrl.u32 %v271, 7
      %v273 = vsub.s32 %v270, %v272
      %v274 = vrot.slane %v216, %v273
      %vm275 = vcmask 392512
      %v276 = vsel %vm275, %v274, %v269
      %v277 = vadd.s32 %v237, 4294967248
      %v278 = vlaneseq
      %v279 = vshrl.u32 %v278, 7
      %v280 = vsub.s32 %v277, %v279
      %v281 = vrot.slane %v217, %v280
      %vm282 = vcmask 458112
      %v283 = vsel %vm282, %v281, %v276
      %v284 = vadd.s32 %v237, 4294967240
      %v285 = vlaneseq
      %v286 = vshrl.u32 %v285, 7
      %v287 = vsub.s32 %v284, %v286
      %v288 = vrot.slane %v218, %v287
      %vm289 = vcmask 523712
      %v290 = vsel %vm289, %v288, %v283
      %vm291 = vcmask 523264
      %v292 = vsel %vm291, %v290, 0
      %294 = vmatprep.subr.mxu0 0.0
      %295 = vmatpush1.msra.mxu0 0.0
      %296 = vmatprep.subr.mxu0 0.0
      %297 = vmatpush1.msra.mxu0 0.0
      %298 = vmatprep.subr.mxu0 0.0
      %299 = vmatpush1.msra.mxu0 0.0
      %300 = vmatprep.subr.mxu0 0.0
      %301 = vmatpush1.msra.mxu0 0.0
      %302 = vmatprep.subr.mxu0 0.0
      %303 = vmatpush1.msra.mxu0 0.0
      %304 = vmatprep.subr.mxu0 0.0
      %305 = vmatpush1.msra.mxu0 0.0
      %306 = vmatprep.subr.mxu0 0.0
      %307 = vmatpush1.msra.mxu0 0.0
      %308 = vmatprep.subr.mxu0 0.0
      %309 = vmatpush1.msra.mxu0 0.0
      %310 = vmatprep.subr.mxu0 0.0
      %311 = vmatpush1.msra.mxu0 %v226
      %312 = vmatprep.subr.mxu0 0.0
      %313 = vmatpush1.msra.mxu0 %v225
      %314 = vmatprep.subr.mxu0 0.0
      %315 = vmatpush1.msra.mxu0 %v224
      %316 = vmatprep.subr.mxu0 0.0
      %317 = vmatpush1.msra.mxu0 %v223
      %318 = vmatprep.subr.mxu0 0.0
      %319 = vmatpush1.msra.mxu0 %v222
      %320 = vmatprep.subr.mxu0 0.0
      %321 = vmatpush1.msra.mxu0 %v221
      %322 = vmatprep.subr.mxu0 0.0
      %323 = vmatpush1.msra.mxu0 %v220
      %324 = vmatprep.subr.mxu0 0.0
      %325 = vmatpush1.msra.mxu0 %v219
      %326 = vmatprep.subr.mxu0 0.0
      %327 = vmatpush2.msra.mxu0 0.0
      %328 = vmatprep.subr.mxu0 0.0
      %329 = vmatpush2.msra.mxu0 0.0
      %330 = vmatprep.subr.mxu0 0.0
      %331 = vmatpush2.msra.mxu0 0.0
      %332 = vmatprep.subr.mxu0 0.0
      %333 = vmatpush2.msra.mxu0 0.0
      %334 = vmatprep.subr.mxu0 0.0
      %335 = vmatpush2.msra.mxu0 0.0
      %336 = vmatprep.subr.mxu0 0.0
      %337 = vmatpush2.msra.mxu0 0.0
      %338 = vmatprep.subr.mxu0 0.0
      %339 = vmatpush2.msra.mxu0 0.0
      %340 = vmatprep.subr.mxu0 0.0
      %341 = vmatpush2.msra.mxu0 0.0
      %342 = vmatprep.subr.mxu0 0.0
      %343 = vmatpush2.msra.mxu0 0.0
      %344 = vmatprep.subr.mxu0 0.0
      %345 = vmatpush2.msra.mxu0 0.0
      %346 = vmatprep.subr.mxu0 0.0
      %347 = vmatpush2.msra.mxu0 0.0
      %348 = vmatprep.subr.mxu0 0.0
      %349 = vmatpush2.msra.mxu0 0.0
      %350 = vmatprep.subr.mxu0 0.0
      %351 = vmatpush2.msra.mxu0 0.0
      %352 = vmatprep.subr.mxu0 0.0
      %353 = vmatpush2.msra.mxu0 0.0
      %354 = vmatprep.subr.mxu0 0.0
      %355 = vmatpush2.msra.mxu0 0.0
      %356 = vmatprep.subr.mxu0 0.0
      %357 = vmatpush2.msra.mxu0 0.0
      %358 = vmatprep.mubr.f32.mxu0 0.0
      %359 = vmatmul.mubr.f32.gmra.mxu0 %v292
      %v360 = vpop.f32.mrf.mxu0
      %v361 = vadd.f32 0.0, %v360
      %v362 = vpop.f32.mrf.mxu0
      %363 = vdwg.mxu0
      %v364 = vmax.f32 %v361, 0.0
      %vm365 = vcmask 31744
      %v367 = vsel %vm365, %v364, 0
      %vm369 = vcmask 1043456
      %v371 = vsel %vm369, %v227, 0
      %373 = vmatprep.subr.mxu0 0.0
      %374 = vmatpush1.msra.mxu0 0.0
      %375 = vmatprep.subr.mxu0 0.0
      %376 = vmatpush1.msra.mxu0 0.0
      %377 = vmatprep.subr.mxu0 0.0
      %378 = vmatpush1.msra.mxu0 0.0
      %379 = vmatprep.subr.mxu0 0.0
      %380 = vmatpush1.msra.mxu0 0.0
      %381 = vmatprep.subr.mxu0 0.0
      %382 = vmatpush1.msra.mxu0 0.0
      %383 = vmatprep.subr.mxu0 0.0
      %384 = vmatpush1.msra.mxu0 0.0
      %385 = vmatprep.subr.mxu0 0.0
      %386 = vmatpush1.msra.mxu0 0.0
      %387 = vmatprep.subr.mxu0 0.0
      %388 = vmatpush1.msra.mxu0 0.0
      %389 = vmatprep.subr.mxu0 0.0
      %390 = vmatpush1.msra.mxu0 0.0
      %391 = vmatprep.subr.mxu0 0.0
      %392 = vmatpush1.msra.mxu0 0.0
      %393 = vmatprep.subr.mxu0 0.0
      %394 = vmatpush1.msra.mxu0 0.0
      %395 = vmatprep.subr.mxu0 0.0
      %396 = vmatpush1.msra.mxu0 0.0
      %397 = vmatprep.subr.mxu0 0.0
      %398 = vmatpush1.msra.mxu0 0.0
      %399 = vmatprep.subr.mxu0 0.0
      %400 = vmatpush1.msra.mxu0 0.0
      %401 = vmatprep.subr.mxu0 0.0
      %402 = vmatpush1.msra.mxu0 0.0
      %403 = vmatprep.subr.mxu0 0.0
      %404 = vmatpush1.msra.mxu0 %v371
      %405 = vmatprep.subr.mxu0 0.0
      %406 = vmatpush2.msra.mxu0 0.0
      %407 = vmatprep.subr.mxu0 0.0
      %408 = vmatpush2.msra.mxu0 0.0
      %409 = vmatprep.subr.mxu0 0.0
      %410 = vmatpush2.msra.mxu0 0.0
      %411 = vmatprep.subr.mxu0 0.0
      %412 = vmatpush2.msra.mxu0 0.0
      %413 = vmatprep.subr.mxu0 0.0
      %414 = vmatpush2.msra.mxu0 0.0
      %415 = vmatprep.subr.mxu0 0.0
      %416 = vmatpush2.msra.mxu0 0.0
      %417 = vmatprep.subr.mxu0 0.0
      %418 = vmatpush2.msra.mxu0 0.0
      %419 = vmatprep.subr.mxu0 0.0
      %420 = vmatpush2.msra.mxu0 0.0
      %421 = vmatprep.subr.mxu0 0.0
      %422 = vmatpush2.msra.mxu0 0.0
      %423 = vmatprep.subr.mxu0 0.0
      %424 = vmatpush2.msra.mxu0 0.0
      %425 = vmatprep.subr.mxu0 0.0
      %426 = vmatpush2.msra.mxu0 0.0
      %427 = vmatprep.subr.mxu0 0.0
      %428 = vmatpush2.msra.mxu0 0.0
      %429 = vmatprep.subr.mxu0 0.0
      %430 = vmatpush2.msra.mxu0 0.0
      %431 = vmatprep.subr.mxu0 0.0
      %432 = vmatpush2.msra.mxu0 0.0
      %433 = vmatprep.subr.mxu0 0.0
      %434 = vmatpush2.msra.mxu0 0.0
      %435 = vmatprep.subr.mxu0 0.0
      %436 = vmatpush2.msra.mxu0 0.0
      %437 = vmatprep.mubr.f32.mxu0 0.0
      %438 = vmatmul.mubr.f32.gmra.mxu0 %v367
      %v439 = vpop.f32.mrf.mxu0
      %v440 = vadd.f32 0.0, %v439
      %v441 = vpop.f32.mrf.mxu0
      %442 = vdwg.mxu0
      %v443 = vxor.u32 %v440, 2147483648
      %v444 = vmul.f32 %v443, 1.442695
      %v445 = vpow.pop %v444
      %v446 = vadd.f32 %v445, 1.0
      %v447 = vrcp.pop %v446
      %v448 = vmul.f32 1.0, %v447
      %v449 = vlaneseq
      %v450 = vshrl.u32 %v449, 7
      %v451 = vsub.s32 0, %v450
      %v452 = vrot.slane %v448, %v451
      %454 = vbcast.lane.b32.xlu0 %v452, 256
      %v455 = vpop.permute.xlu0 %454
      %s457 = sor.u32 256, 8
      %458 = vbcast.lane.b32.xlu0 %v452, %s457
      %v459 = vpop.permute.xlu0 %458
      %s461 = sor.u32 256, 16
      %462 = vbcast.lane.b32.xlu0 %v452, %s461
      %v463 = vpop.permute.xlu0 %462
      %s465 = sor.u32 256, 24
      %466 = vbcast.lane.b32.xlu0 %v452, %s465
      %v467 = vpop.permute.xlu0 %466
      %s469 = sor.u32 256, 32
      %470 = vbcast.lane.b32.xlu0 %v452, %s469
      %v471 = vpop.permute.xlu0 %470
      %s473 = sor.u32 256, 40
      %474 = vbcast.lane.b32.xlu0 %v452, %s473
      %v475 = vpop.permute.xlu0 %474
      %s477 = sor.u32 256, 48
      %478 = vbcast.lane.b32.xlu0 %v452, %s477
      %v479 = vpop.permute.xlu0 %478
      %s481 = sor.u32 256, 56
      %482 = vbcast.lane.b32.xlu0 %v452, %s481
      %v483 = vpop.permute.xlu0 %482
      %v484 = vmul.f32 %v171, %v455
      %v485 = vmul.f32 %v172, %v455
      %v486 = vmul.f32 %v173, %v459
      %v487 = vmul.f32 %v174, %v459
      %v488 = vmul.f32 %v175, %v463
      %v489 = vmul.f32 %v176, %v463
      %v490 = vmul.f32 %v177, %v467
      %v491 = vmul.f32 %v178, %v467
      %v492 = vmul.f32 %v179, %v471
      %v493 = vmul.f32 %v180, %v471
      %v494 = vmul.f32 %v181, %v475
      %v495 = vmul.f32 %v182, %v475
      %v496 = vmul.f32 %v183, %v479
      %v497 = vmul.f32 %v184, %v479
      %v498 = vmul.f32 %v185, %v483
      %v499 = vmul.f32 %v186, %v483
      %500 = vst [vmem:[%s170] sm:$0xff] %v484
      %501 = vst [vmem:[%s170 + $0x8] sm:$0xff] %v485
      %502 = vst [vmem:[%s170 + $0x10] sm:$0xff] %v486
      %503 = vst [vmem:[%s170 + $0x18] sm:$0xff] %v487
      %504 = vst [vmem:[%s170 + $0x20] sm:$0xff] %v488
      %505 = vst [vmem:[%s170 + $0x28] sm:$0xff] %v489
      %506 = vst [vmem:[%s170 + $0x30] sm:$0xff] %v490
      %507 = vst [vmem:[%s170 + $0x38] sm:$0xff] %v491
      %508 = vst [vmem:[%s170 + $0x40] sm:$0xff] %v492
      %509 = vst [vmem:[%s170 + $0x48] sm:$0xff] %v493
      %510 = vst [vmem:[%s170 + $0x50] sm:$0xff] %v494
      %511 = vst [vmem:[%s170 + $0x58] sm:$0xff] %v495
      %512 = vst [vmem:[%s170 + $0x60] sm:$0xff] %v496
      %513 = vst [vmem:[%s170 + $0x68] sm:$0xff] %v497
      %514 = vst [vmem:[%s170 + $0x70] sm:$0xff] %v498
      %515 = vst [vmem:[%s170 + $0x78] sm:$0xff] %v499
      %p516 = scmp.lt.s32.totalorder %s14, 1
      %s517 = scalar_select %p516, %s14, 1
      %s518 = smul.addr %s517, 16
      %s519 = smul.addr %s518, 8
      %s520 = scalar_lea.vmem %s3, %s519
      // Predicated region
      $region33: #{se_block.1} parent=31 // pred_check
        %p521 = pneg %p100
      $region34: #{se_block.1} parent=31 // pred_check_branch
        %523 = sbr.rel (%p521) target = $region36
      $region35: #{se_block.1} parent=31 // pred_region
        _
      $region36: #{se_block.1} parent=31 // pred_fallthru
        _
    $region32: #{se_block.1} parent=5 // pred_fallthru
      _
    %p524 = scmp.le.s32.totalorder 2, %s9
    // Predicated region
    $region37: #{se_block.1} parent=5 // pred_check
      %p525 = pneg %p524
    $region38: #{se_block.1} parent=5 // pred_check_branch
      %527 = sbr.rel (%p525) target = $region40
    $region39: #{se_block.1} parent=5 // pred_region
      %s528 = ssub.s32 %s9, 2
      // Predicated region
      $region41: #{se_block.1} parent=39 // pred_check
        %p529 = pneg %p106
      $region42: #{se_block.1} parent=39 // pred_check_branch
        %531 = sbr.rel (%p529) target = $region44
      $region43: #{se_block.1} parent=39 // pred_region
        %p532 = scmp.lt.s32.totalorder %s15, 1
        %s533 = scalar_select %p532, %s15, 1
        %s534 = smul.addr %s533, 16
        %s535 = smul.addr %s534, 8
        %s536 = scalar_lea.vmem %s3, %s535
      $region44: #{se_block.1} parent=39 // pred_fallthru
        _
    $region40: #{se_block.1} parent=5 // pred_fallthru
      _
  $region6: #{se_block.1} parent=0 // loop_footer
    %s13 = sadd.s32 1, %s9
  $region7: #{se_block.1} parent=0 // loop_footer_branch
    %8 = sbr.rel target = $region3
  $region8: #{se_block.1} parent=0 // loop_exit
    _

</llo_original>
